<compile_context>
chip_gen: v5e
topology: v5e:2x2
jax: 0.10.0
libtpu: 0.0.40
codegen_flags: <defaults>
</compile_context>

<pallas_src>
import math

import jax
import jax.numpy as jnp
from jax.experimental import pallas as pl
from jax.experimental.pallas import tpu as pltpu


_HBM_ROWS_PER_STEP = 8     # tokens gathered per grid step on the HBM path
_ROWS_PER_GROUP = 8        # rows staged per dense store in the row-copy path


def _round_up(x, m):
    return ((x + m - 1) // m) * m


def _vmem_budget_bytes():
    """~75% of physical per-core VMEM (~48 MiB on v7x, ~96 MiB on v5e/v6e)."""
    cap = 64 * 1024 * 1024  # conservative default (v7x-sized VMEM)
    try:
        info = pltpu.get_tpu_info()
        cap = int(getattr(info, "vmem_capacity_bytes", cap)) or cap
    except Exception:
        pass
    return (3 * cap) // 4


def _default_onehot_max_vocab():
    """v5e's 4x128 MXU @197 TF/s makes large one-hot matmuls less attractive;
    v6e/v7x (918/996 TF/s) happily take vocabs up to ~8k on the MXU path."""
    try:
        kind = jax.devices()[0].device_kind.lower()
    except Exception:
        kind = ""
    if "v5 lite" in kind or "v5e" in kind or "v5lite" in kind:
        return 2048
    return 8192


# Cache: does this JAX/libtpu build honor per-operand buffer counts
# (BlockSpec pipeline_mode=pl.Buffered(k)) in the pallas_call pipeline?
_PIPELINE_MODE_OK = {}


def _maybe_buffered(buffer_count):
    """pl.Buffered(buffer_count) if supported by this build, else None
    (fall back to the default double-buffered pipeline)."""
    if buffer_count not in _PIPELINE_MODE_OK:
        def _probe_kernel(x_ref, o_ref):
            o_ref[...] = x_ref[...]
        try:
            mode = pl.Buffered(buffer_count)
            out = pl.pallas_call(
                _probe_kernel,
                out_shape=jax.ShapeDtypeStruct((16, 128), jnp.float32),
                grid=(2,),
                in_specs=[pl.BlockSpec((8, 128), lambda i: (0, 0),
                                       pipeline_mode=mode)],
                out_specs=pl.BlockSpec((8, 128), lambda i: (i, 0)),
            )(jnp.zeros((8, 128), jnp.float32))
            jax.block_until_ready(out)
            _PIPELINE_MODE_OK[buffer_count] = True
        except Exception:
            _PIPELINE_MODE_OK[buffer_count] = False
    return pl.Buffered(buffer_count) if _PIPELINE_MODE_OK[buffer_count] else None


# ---------------------------------------------------------------------------
# Path 1: table resident in VMEM, gather as a one-hot matmul on the MXU.
# (Used only for sub-32-bit float tables, where one MXU pass is exact.)
# ---------------------------------------------------------------------------
def _onehot_gather_kernel(ids_ref, table_ref, out_ref):
    # ids_ref:   (T, 1) int32  token ids for this chunk (one per sublane row)
    # table_ref: (V, Dp)       full table; constant block index -> DMA'd once
    # out_ref:   (T, Dp)       dense output tile
    t = ids_ref.shape[0]
    v = table_ref.shape[0]
    col_ids = jax.lax.broadcasted_iota(jnp.int32, (t, v), 1)
    one_hot = (ids_ref[...] == col_ids).astype(table_ref.dtype)
    out_ref[...] = jnp.dot(
        one_hot, table_ref[...], preferred_element_type=jnp.float32
    ).astype(out_ref.dtype)


def _gather_resident_onehot(ids_col, table, t, vmem_limit, table_mode):
    n_pad = ids_col.shape[0]
    v, dp = table.shape
    return pl.pallas_call(
        _onehot_gather_kernel,
        out_shape=jax.ShapeDtypeStruct((n_pad, dp), table.dtype),
        grid_spec=pltpu.PrefetchScalarGridSpec(
            num_scalar_prefetch=0,
            grid=(n_pad // t,),
            in_specs=[
                pl.BlockSpec((t, 1), lambda c: (c, 0)),
                # Resident table: constant index map, single-buffered if the
                # build supports it (second buffer would be dead VMEM).
                pl.BlockSpec((v, dp), lambda c: (0, 0), pipeline_mode=table_mode),
            ],
            out_specs=pl.BlockSpec((t, dp), lambda c: (c, 0)),
        ),
        compiler_params=pltpu.CompilerParams(
            dimension_semantics=("parallel",),
            vmem_limit_bytes=vmem_limit,
        ),
    )(ids_col, table)


# ---------------------------------------------------------------------------
# Path 2: table resident in VMEM, row-copy gather (exact for any dtype).
# 8 rows staged per iteration -> one dense (8, Dp) store (no vst.msk stores).
# ---------------------------------------------------------------------------
def _rowcopy_gather_kernel(ids_smem, table_ref, out_ref):
    # ids_smem: (n_pad,) int32 scalar-prefetched token ids in SMEM
    # table_ref:(V, Dp) full table, resident in VMEM across the whole grid
    # out_ref:  (T, Dp) dense output tile
    t = out_ref.shape[0]
    base = pl.program_id(0) * t

    def body(g, carry):
        row0 = pl.multiple_of(g * _ROWS_PER_GROUP, _ROWS_PER_GROUP)
        rows = [
            table_ref[pl.ds(ids_smem[base + row0 + j], 1), :]
            for j in range(_ROWS_PER_GROUP)
        ]
        # One dense (8, Dp) store instead of eight 1-sublane masked stores.
        out_ref[pl.ds(row0, _ROWS_PER_GROUP), :] = jnp.concatenate(rows, axis=0)
        return carry

    jax.lax.fori_loop(0, t // _ROWS_PER_GROUP, body, 0)


def _gather_resident_rowcopy(ids_flat, table, t, vmem_limit, table_mode):
    n_pad = ids_flat.shape[0]
    v, dp = table.shape
    return pl.pallas_call(
        _rowcopy_gather_kernel,
        out_shape=jax.ShapeDtypeStruct((n_pad, dp), table.dtype),
        grid_spec=pltpu.PrefetchScalarGridSpec(
            num_scalar_prefetch=1,
            grid=(n_pad // t,),
            in_specs=[
                pl.BlockSpec((v, dp), lambda c, ids: (0, 0),
                             pipeline_mode=table_mode),
            ],
            out_specs=pl.BlockSpec((t, dp), lambda c, ids: (c, 0)),
        ),
        compiler_params=pltpu.CompilerParams(
            dimension_semantics=("parallel",),
            vmem_limit_bytes=vmem_limit,
        ),
    )(ids_flat, table)


# ---------------------------------------------------------------------------
# Path 3: table too large for VMEM - batched HBM row gather via scalar
# prefetch: 8 rows per grid step (amortizes ~0.35us/step overhead and keeps
# 8+ row DMAs in flight), one dense (8, Dp) output tile, "parallel" grid so
# v7x's two TensorCores split the token loop.
# ---------------------------------------------------------------------------
def _hbm_row_gather_kernel(ids_smem, *refs):
    del ids_smem                      # consumed by the index_maps
    out_ref = refs[-1]
    out_ref[...] = jnp.concatenate([r[...] for r in refs[:-1]], axis=0)


def _gather_hbm_rows(ids_flat, table, vmem_limit):
    # TODO(synk): a manual memory_space=pl.ANY + make_async_copy gather with
    # 4-8 outstanding DMAs into a (T, Dp) staging tile would hide even more
    # per-row DMA latency than BlockSpec pipelining.
    n_pad = ids_flat.shape[0]
    v, dp = table.shape
    k = _HBM_ROWS_PER_STEP
    row_mode = _maybe_buffered(4)     # deeper pipeline for tiny row DMAs

    def row_map(j):
        return lambda i, ids, j=j: (ids[i * k + j], 0)

    in_specs = [
        pl.BlockSpec((1, dp), row_map(j), pipeline_mode=row_mode)
        for j in range(k)
    ]
    return pl.pallas_call(
        _hbm_row_gather_kernel,
        out_shape=jax.ShapeDtypeStruct((n_pad, dp), table.dtype),
        grid_spec=pltpu.PrefetchScalarGridSpec(
            num_scalar_prefetch=1,
            grid=(n_pad // k,),
            in_specs=in_specs,
            out_specs=pl.BlockSpec((k, dp), lambda i, ids: (i, 0)),
        ),
        compiler_params=pltpu.CompilerParams(
            dimension_semantics=("parallel",),   # v7x: split across both TCs
            vmem_limit_bytes=vmem_limit,
        ),
    )(ids_flat, *([table] * k))


def _call_in_pieces(fn, ids, step_multiple, max_tokens):
    """Cap the scalar-prefetched id array per pallas_call: 1-D SMEM arrays pad
    to next_pow2(4N) bytes, so unbounded sequences would blow SMEM."""
    n = ids.shape[0]
    cap = max(step_multiple, (max_tokens // step_multiple) * step_multiple)
    if n <= cap:
        return fn(ids)
    return jnp.concatenate(
        [fn(ids[s:s + cap]) for s in range(0, n, cap)], axis=0)


# ---------------------------------------------------------------------------
# Public wrapper: equivalent of PretrainedEmbeddings.forward(sequence).
# ---------------------------------------------------------------------------
def pretrained_embeddings(sequence, word_embeddings, *, tokens_per_chunk=None,
                          one_hot_max_vocab=None, max_tokens_per_call=32768,
                          force_path=None):
    """sequence: int array [...], word_embeddings: [vocab, emb_dim].

    Returns a float array of shape sequence.shape + (emb_dim,), same dtype as
    the embedding table (same semantics as a frozen nn.Embedding lookup).
    `force_path` in {None, "onehot", "rowcopy", "hbm"} is for testing only.
    """
    if force_path not in (None, "onehot", "rowcopy", "hbm"):
        raise ValueError(f"unknown force_path: {force_path!r}")

    seq_shape = tuple(sequence.shape)
    v, d = word_embeddings.shape
    dtype = word_embeddings.dtype
    itemsize = jnp.dtype(dtype).itemsize
    n_tokens = int(math.prod(seq_shape))
    if n_tokens == 0:
        return jnp.zeros(seq_shape + (d,), dtype=dtype)

    # int32 ids, clamped to the valid range (see header comment).
    flat_ids = jnp.clip(sequence, 0, v - 1).reshape(-1).astype(jnp.int32)

    # Pad the embedding dim to a lane multiple (128) for dense stores.
    dp = _round_up(d, 128)
    table = word_embeddings
    if dp != d:
        table = jnp.pad(word_embeddings, ((0, 0), (0, dp - d)))

    budget = _vmem_budget_bytes()

    # Resident table footprint: 1x when the build lets us single-buffer the
    # constant block, else the conservative 2x (default double buffering).
    table_mode = _maybe_buffered(1)
    table_bufs = 1 if table_mode is not None else 2
    table_bytes = table_bufs * v * dp * itemsize

    if one_hot_max_vocab is None:
        one_hot_max_vocab = _default_onehot_max_vocab()

    def fits_resident(t, with_onehot):
        out_tiles = 2 * t * dp * itemsize          # double-buffered output
        ids_tiles = 2 * t * 4                      # (t, 1) int32 id blocks
        tmp = t * v * (4 + itemsize) + t * dp * 4 if with_onehot else 0
        return table_bytes + out_tiles + ids_tiles + tmp + (2 << 20) <= budget

    # One MXU pass is exact only for sub-32-bit float tables; f32 tables use
    # the (bit-exact) row-copy path instead of getting bf16-truncated rows.
    small_float = jnp.issubdtype(dtype, jnp.floating) and itemsize <= 2

    path = force_path
    if path is None:
        if v <= one_hot_max_vocab and small_float and fits_resident(8, True):
            path = "onehot"
        elif fits_resident(8, False):
            path = "rowcopy"
        else:
            path = "hbm"

    if path in ("onehot", "rowcopy"):
        # Chunk size: biggest that fits the remaining VMEM (512-1024 when the
        # table is small relative to the budget; drops toward 128 on v7x when
        # the resident table is near the ~48 MiB budget).
        if tokens_per_chunk is not None:
            t = max(8, _round_up(tokens_per_chunk, 8))
        else:
            t = 8
            for cand in (1024, 512, 256, 128, 64, 32, 16, 8):
                if fits_resident(cand, path == "onehot"):
                    t = cand
                    break
        t = min(t, _round_up(n_tokens, 8))
        n_pad = _round_up(n_tokens, t)
        ids = jnp.pad(flat_ids, (0, n_pad - n_tokens))  # pad with id 0 (valid)
        if path == "onehot":
            out_flat = _gather_resident_onehot(
                ids.reshape(n_pad, 1), table, t, budget, table_mode)
        else:
            # TODO(synk): a per-chunk SMEM-space id BlockSpec would avoid
            # re-fetching the resident table once per mega-chunk.
            out_flat = _call_in_pieces(
                lambda chunk: _gather_resident_rowcopy(
                    chunk, table, t, budget, table_mode),
                ids, t, max_tokens_per_call)
    else:
        k = _HBM_ROWS_PER_STEP
        n_pad = _round_up(n_tokens, k)
        ids = jnp.pad(flat_ids, (0, n_pad - n_tokens))
        out_flat = _call_in_pieces(
            lambda chunk: _gather_hbm_rows(chunk, table, budget),
            ids, k, max_tokens_per_call)

    return out_flat[:n_tokens, :d].reshape(*seq_shape, d)


if __name__ == "__main__":
    key = jax.random.PRNGKey(0)
    k1, k2, k3, k4 = jax.random.split(key, 4)

    # Test 1: float32 table (routed to the exact resident row-copy path).
    vocab1, dim1 = 64, 128
    emb1 = jax.random.normal(k1, (vocab1, dim1), dtype=jnp.float32)
    seq1 = jax.random.randint(k2, (2, 8), minval=0, maxval=vocab1,
                              dtype=jnp.int32)
    out1 = jax.block_until_ready(pretrained_embeddings(seq1, emb1))
    ref1 = jnp.take(emb1, seq1.reshape(-1), axis=0).reshape(2, 8, dim1)
    assert out1.shape == (2, 8, dim1) and out1.dtype == emb1.dtype
    assert jnp.allclose(out1, ref1, atol=1e-6, rtol=1e-6)

    # Test 2: bf16 table, emb dim not a lane multiple, seq not a multiple of 8
    # (exercises the one-hot MXU resident path plus pad/slice handling).
    vocab2, dim2 = 96, 100
    emb2 = jax.random.normal(k3, (vocab2, dim2),
                             dtype=jnp.float32).astype(jnp.bfloat16)
    seq2 = jax.random.randint(k4, (2, 7), minval=0, maxval=vocab2,
                              dtype=jnp.int32)
    out2 = jax.block_until_ready(pretrained_embeddings(seq2, emb2))
    ref2 = jnp.take(emb2, seq2.reshape(-1), axis=0).reshape(2, 7, dim2)
    assert out2.shape == (2, 7, dim2) and out2.dtype == jnp.bfloat16
    assert jnp.allclose(out2.astype(jnp.float32), ref2.astype(jnp.float32),
                        atol=1e-2, rtol=1e-2)

    # Test 3: force the batched HBM row-gather fallback on the small table.
    out3 = jax.block_until_ready(
        pretrained_embeddings(seq1, emb1, force_path="hbm"))
    assert out3.shape == (2, 8, dim1) and out3.dtype == emb1.dtype
    assert jnp.allclose(out3, ref1, atol=1e-6, rtol=1e-6)

    print("KERNEL_OK")
</pallas_src>

<mosaic_0001>
module attributes {stable_mosaic.version = 11 : i64} {
  func.func @_probe_kernel(%arg0: i32, %arg1: memref<8x128xf32, #tpu.memory_space<vmem>>, %arg2: memref<8x128xf32, #tpu.memory_space<vmem>>) attributes {dimension_semantics = [#tpu.dimension_semantics<arbitrary>], iteration_bounds = array<i64: 2>, scalar_prefetch = 0 : i64, scratch_operands = 0 : i64, tpu.core_type = #tpu.core_type<tc>, window_params = [{pipeline_mode = #tpu.pipeline_mode<synchronous>, transform_indices = @transform_0, window_bounds = array<i64: 8, 128>}, {transform_indices = @transform_1, window_bounds = array<i64: 8, 128>}]} {
    %c0 = arith.constant 0 : index
    %c0_0 = arith.constant 0 : index
    %0 = vector.load %arg1[%c0, %c0_0] : memref<8x128xf32, #tpu.memory_space<vmem>>, vector<8x128xf32>
    %c0_1 = arith.constant 0 : index
    %c0_2 = arith.constant 0 : index
    %1 = vector.load %arg2[%c0_1, %c0_2] : memref<8x128xf32, #tpu.memory_space<vmem>>, vector<8x128xf32>
    tpu.vector_store %arg2[%c0_1, %c0_2], %0 {strides = array<i32>} : memref<8x128xf32, #tpu.memory_space<vmem>>, vector<8x128xf32>,
    return
  }
  func.func @transform_0(%arg0: i32) -> (i32, i32) {
    %c0_i32 = arith.constant 0 : i32
    %c0_i32_0 = arith.constant 0 : i32
    %c0_i32_1 = arith.constant 0 : i32
    return %c0_i32, %c0_i32_0 : i32, i32
  }
  func.func @transform_1(%arg0: i32) -> (i32, i32) {
    %c0_i32 = arith.constant 0 : i32
    %c0_i32_0 = arith.constant 0 : i32
    return %arg0, %c0_i32 : i32, i32
  }
}

module attributes {stable_mosaic.version = 11 : i64} {
  func.func @_rowcopy_gather_kernel(%arg0: i32, %arg1: memref<16xi32, #tpu.memory_space<smem>>, %arg2: memref<64x128xf32, #tpu.memory_space<vmem>>, %arg3: memref<16x128xf32, #tpu.memory_space<vmem>>) attributes {dimension_semantics = [#tpu.dimension_semantics<parallel>], iteration_bounds = array<i64: 1>, scalar_prefetch = 1 : i64, scratch_operands = 0 : i64, tpu.core_type = #tpu.core_type<tc>, window_params = [{pipeline_mode = #tpu.pipeline_mode<synchronous>, transform_indices = @transform_0, window_bounds = array<i64: 64, 128>}, {transform_indices = @transform_1, window_bounds = array<i64: 16, 128>}]} {
    %c16_i32 = arith.constant 16 : i32
    %0 = arith.muli %arg0, %c16_i32 : i32
    %c0_i32 = arith.constant 0 : i32
    %c2_i32 = arith.constant 2 : i32
    %1 = arith.addi %c0_i32, %c2_i32 : i32
    %c1_i32 = arith.constant 1 : i32
    scf.for %arg4 = %c0_i32 to %1 step %c1_i32  : i32 {
      %c8_i32 = arith.constant 8 : i32
      %2 = arith.muli %arg4, %c8_i32 : i32
      %3 = tpu.assume_multiple %2, 8 : i32
      %4 = arith.addi %0, %3 : i32
      %c0_i32_1 = arith.constant 0 : i32
      %5 = arith.addi %4, %c0_i32_1 : i32
      %6 = arith.index_cast %5 : i32 to index
      %7 = memref.load %arg1[%6] : memref<16xi32, #tpu.memory_space<smem>>
      %8 = arith.index_cast %7 : i32 to index
      %c0 = arith.constant 0 : index
      %9 = vector.load %arg2[%8, %c0] : memref<64x128xf32, #tpu.memory_space<vmem>>, vector<1x128xf32>
      %10 = arith.addi %0, %3 : i32
      %c1_i32_2 = arith.constant 1 : i32
      %11 = arith.addi %10, %c1_i32_2 : i32
      %12 = arith.index_cast %11 : i32 to index
      %13 = memref.load %arg1[%12] : memref<16xi32, #tpu.memory_space<smem>>
      %14 = arith.index_cast %13 : i32 to index
      %c0_3 = arith.constant 0 : index
      %15 = vector.load %arg2[%14, %c0_3] : memref<64x128xf32, #tpu.memory_space<vmem>>, vector<1x128xf32>
      %16 = arith.addi %0, %3 : i32
      %c2_i32_4 = arith.constant 2 : i32
      %17 = arith.addi %16, %c2_i32_4 : i32
      %18 = arith.index_cast %17 : i32 to index
      %19 = memref.load %arg1[%18] : memref<16xi32, #tpu.memory_space<smem>>
      %20 = arith.index_cast %19 : i32 to index
      %c0_5 = arith.constant 0 : index
      %21 = vector.load %arg2[%20, %c0_5] : memref<64x128xf32, #tpu.memory_space<vmem>>, vector<1x128xf32>
      %22 = arith.addi %0, %3 : i32
      %c3_i32 = arith.constant 3 : i32
      %23 = arith.addi %22, %c3_i32 : i32
      %24 = arith.index_cast %23 : i32 to index
      %25 = memref.load %arg1[%24] : memref<16xi32, #tpu.memory_space<smem>>
      %26 = arith.index_cast %25 : i32 to index
      %c0_6 = arith.constant 0 : index
      %27 = vector.load %arg2[%26, %c0_6] : memref<64x128xf32, #tpu.memory_space<vmem>>, vector<1x128xf32>
      %28 = arith.addi %0, %3 : i32
      %c4_i32 = arith.constant 4 : i32
      %29 = arith.addi %28, %c4_i32 : i32
      %30 = arith.index_cast %29 : i32 to index
      %31 = memref.load %arg1[%30] : memref<16xi32, #tpu.memory_space<smem>>
      %32 = arith.index_cast %31 : i32 to index
      %c0_7 = arith.constant 0 : index
      %33 = vector.load %arg2[%32, %c0_7] : memref<64x128xf32, #tpu.memory_space<vmem>>, vector<1x128xf32>
      %34 = arith.addi %0, %3 : i32
      %c5_i32 = arith.constant 5 : i32
      %35 = arith.addi %34, %c5_i32 : i32
      %36 = arith.index_cast %35 : i32 to index
      %37 = memref.load %arg1[%36] : memref<16xi32, #tpu.memory_space<smem>>
      %38 = arith.index_cast %37 : i32 to index
      %c0_8 = arith.constant 0 : index
      %39 = vector.load %arg2[%38, %c0_8] : memref<64x128xf32, #tpu.memory_space<vmem>>, vector<1x128xf32>
      %40 = arith.addi %0, %3 : i32
      %c6_i32 = arith.constant 6 : i32
      %41 = arith.addi %40, %c6_i32 : i32
      %42 = arith.index_cast %41 : i32 to index
      %43 = memref.load %arg1[%42] : memref<16xi32, #tpu.memory_space<smem>>
      %44 = arith.index_cast %43 : i32 to index
      %c0_9 = arith.constant 0 : index
      %45 = vector.load %arg2[%44, %c0_9] : memref<64x128xf32, #tpu.memory_space<vmem>>, vector<1x128xf32>
      %46 = arith.addi %0, %3 : i32
      %c7_i32 = arith.constant 7 : i32
      %47 = arith.addi %46, %c7_i32 : i32
      %48 = arith.index_cast %47 : i32 to index
      %49 = memref.load %arg1[%48] : memref<16xi32, #tpu.memory_space<smem>>
      %50 = arith.index_cast %49 : i32 to index
      %c0_10 = arith.constant 0 : index
      %51 = vector.load %arg2[%50, %c0_10] : memref<64x128xf32, #tpu.memory_space<vmem>>, vector<1x128xf32>
      %52 = tpu.concatenate %9, %15, %21, %27, %33, %39, %45, %51 in 0 : vector<1x128xf32>, vector<1x128xf32>, vector<1x128xf32>, vector<1x128xf32>, vector<1x128xf32>, vector<1x128xf32>, vector<1x128xf32>, vector<1x128xf32> -> vector<8x128xf32>
      %53 = arith.index_cast %3 : i32 to index
      %c0_11 = arith.constant 0 : index
      %54 = vector.load %arg3[%53, %c0_11] : memref<16x128xf32, #tpu.memory_space<vmem>>, vector<8x128xf32>
      tpu.vector_store %arg3[%53, %c0_11], %52 {strides = array<i32>} : memref<16x128xf32, #tpu.memory_space<vmem>>, vector<8x128xf32>,
    }
    %c2_i32_0 = arith.constant 2 : i32
    return
  }
  func.func @transform_0(%arg0: i32, %arg1: memref<16xi32, #tpu.memory_space<smem>>) -> (i32, i32) {
    %c0_i32 = arith.constant 0 : i32
    %c0_i32_0 = arith.constant 0 : i32
    %c0_i32_1 = arith.constant 0 : i32
    return %c0_i32, %c0_i32_0 : i32, i32
  }
  func.func @transform_1(%arg0: i32, %arg1: memref<16xi32, #tpu.memory_space<smem>>) -> (i32, i32) {
    %c0_i32 = arith.constant 0 : i32
    %c0_i32_0 = arith.constant 0 : i32
    return %arg0, %c0_i32 : i32, i32
  }
}

</mosaic_0001>

<llo_original>
// kernel: tpu_custom_call.1
$region0: #{tpu_custom_call.1}
  #allocation0 [shape = 'u32[]', space=smem, size = 0x4, offset = 0x4, fixed_abs, tag = 'smem constant byte address 0x4 - core index']
  #allocation1 [shape = 'u32[72,128]{1,0:T(1,128)}', space=vmem, size = 0x9000, scoped, tag = 'internal scratch']
  %s0 = inlined_call_operand.hbm [shape: f32[8,128], index: 0, kind: input, shape index: {}]
  %s1 = inlined_call_operand.hbm [shape: f32[16,128], index: 1, kind: output, shape index: {}]
  %s2 = sld [smem:[#allocation0]]
  $region41: #{tpu_custom_call.1} parent=0
    _
  %s4 = ssub.s32 1, %s2
  %s5 = scalar_select 0, %s4, %s2
  $region1: #{tpu_custom_call.1} parent=0
    #allocation2 [shape = 'u8[4096]{0}', space=vmem, size = 0x1000, scoped, tag = 'input window, operand 0, single buffered']
    #allocation3 [shape = 's32[2]{0}', space=sflag, size = 0x8, scoped, tag = 'scoped memory for tpu_custom_call.1']
    #allocation4 [shape = 's32[2]{0}', space=sflag, size = 0x8, scoped, tag = 'scoped memory for tpu_custom_call.1']
    #allocation5 [shape = 'u8[8192]{0}', space=vmem, size = 0x2000, scoped, tag = 'output window, operand 0']
    %6 = vsyncpa [#allocation3], 0
    %7 = vsyncpa [#allocation4], 0
    %s8 = scalar_lea.sflag [#allocation4], 1
    %9 = vsyncpa %s8, 0
    loop: start=0, step=1, limit=4
    $region2: #{tpu_custom_call.1} parent=1 // loop_pre_header
      _
    $region3: #{tpu_custom_call.1} parent=1 // loop_header
      %s11 = sphi 0, %s15
      %p12 = scmp.ge.s32.totalorder %s11, 4
      %s19 = sphi 0, %s19
      %s21 = sphi 0, %s19
      %s22 = sphi 0, %s21
      %s36 = sphi 0, %s22
      %s42 = sphi 0, %s44
      %s45 = sphi 0, %s42
      %s46 = sphi 0, %s45
      %s62 = sphi 0, %s46
    $region4: #{tpu_custom_call.1} parent=1 // loop_header_branch
      %14 = sbr.rel (%p12) target = $region8
    $region5: #{tpu_custom_call.1} parent=1 // loop_body
      %s16 = ssub.s32 %s11, 1
      %s17 = ssub.s32 %s11, 2
      %s18 = sadd.s32 %s11, 1
      %s20 = sadd.s32 %s19, 1
      %p23 = scmp.eq.s32.totalorder %s11, 1
      %p24 = scmp.ne.s32.totalorder %s19, %s21
      %p25 = scmp.eq.s32.totalorder %s11, 0
      %p26 = por %p24, %p25
      %p27 = scmp.ne.s32.totalorder %s19, %s21
      %p28 = scmp.eq.s32.totalorder %s16, 1
      %p29 = por %p27, %p28
      %p30 = scmp.ne.s32.totalorder %s21, %s22
      %p31 = scmp.eq.s32.totalorder %s16, 0
      %p32 = por %p30, %p31
      %p33 = scmp.ne.s32.totalorder %s21, %s22
      %p34 = scmp.eq.s32.totalorder %s17, 1
      %p35 = por %p33, %p34
      %p37 = scmp.ne.s32.totalorder %s22, %s36
      %p38 = scmp.eq.s32.totalorder %s17, 0
      %p39 = por %p37, %p38
      %s40 = ssub.s32 %s11, %s18
      %p41 = scmp.eq.s32.totalorder %s40, 0
      %s43 = sadd.s32 %s42, 1
      %s44 = scalar_select %p41, %s42, %s43
      %p47 = pneg %p41
      %p48 = scmp.eq.s32.totalorder %s11, 1
      %p49 = por %p47, %p48
      %p50 = scmp.ne.s32.totalorder %s42, %s45
      %p51 = scmp.eq.s32.totalorder %s11, 0
      %p52 = por %p50, %p51
      %p53 = scmp.ne.s32.totalorder %s42, %s45
      %p54 = scmp.eq.s32.totalorder %s16, 1
      %p55 = por %p53, %p54
      %p56 = scmp.ne.s32.totalorder %s45, %s46
      %p57 = scmp.eq.s32.totalorder %s16, 0
      %p58 = por %p56, %p57
      %p59 = scmp.ne.s32.totalorder %s45, %s46
      %p60 = scmp.eq.s32.totalorder %s17, 1
      %p61 = por %p59, %p60
      %p63 = scmp.ne.s32.totalorder %s46, %s62
      %p64 = scmp.eq.s32.totalorder %s17, 0
      %p65 = por %p63, %p64
      %p66 = scmp.le.s32.totalorder 1, %s11
      %p67 = scmp.lt.s32.totalorder %s11, 3
      %p68 = pnand %p66, %p67
      %p69 = pneg %p68
      // Predicated region
      $region9: #{tpu_custom_call.1} parent=5 // pred_check
        _
      $region10: #{tpu_custom_call.1} parent=5 // pred_check_branch
        %71 = sbr.rel (%p68) target = $region12
      $region11: #{tpu_custom_call.1} parent=5 // pred_region
        %s72 = ssub.s32 %s11, 1
        // Predicated region
        $region13: #{tpu_custom_call.1} parent=11 // pred_check
          %p73 = pneg %p32
        $region14: #{tpu_custom_call.1} parent=11 // pred_check_branch
          %75 = sbr.rel (%p73) target = $region16
        $region15: #{tpu_custom_call.1} parent=11 // pred_region
          %77 = vsyncadd [#allocation3], 0
          %s79 = sshll.u32 %s0, 4
          %s80 = int_to_ptr.hbm [resolvable:$true] %s79
          %s81 = sshll.u32 [#allocation2], 4
          %s82 = int_to_ptr.vmem [resolvable:$true] %s81
          %84 = dma.hbm_to_vmem [thread:$0]  %s80, 128, %s82, [#allocation3]
        $region16: #{tpu_custom_call.1} parent=11 // pred_fallthru
          _
      $region12: #{tpu_custom_call.1} parent=5 // pred_fallthru
        _
      %p85 = scmp.lt.s32.totalorder %s11, 2
      // Predicated region
      $region17: #{tpu_custom_call.1} parent=5 // pred_check
        %p86 = pneg %p85
      $region18: #{tpu_custom_call.1} parent=5 // pred_check_branch
        %88 = sbr.rel (%p86) target = $region20
      $region19: #{tpu_custom_call.1} parent=5 // pred_region
        _
      $region20: #{tpu_custom_call.1} parent=5 // pred_fallthru
        _
      %p89 = scmp.le.s32.totalorder 1, %s11
      %p90 = scmp.lt.s32.totalorder %s11, 3
      %p91 = pnand %p89, %p90
      %p92 = pneg %p91
      // Predicated region
      $region21: #{tpu_custom_call.1} parent=5 // pred_check
        _
      $region22: #{tpu_custom_call.1} parent=5 // pred_check_branch
        %94 = sbr.rel (%p91) target = $region24
      $region23: #{tpu_custom_call.1} parent=5 // pred_region
        %s95 = ssub.s32 %s11, 1
        // Predicated region
        $region25: #{tpu_custom_call.1} parent=23 // pred_check
          %p96 = pneg %p32
        $region26: #{tpu_custom_call.1} parent=23 // pred_check_branch
          %98 = sbr.rel (%p96) target = $region28
        $region27: #{tpu_custom_call.1} parent=23 // pred_region
          %100 = dma.done [#allocation3], 128
        $region28: #{tpu_custom_call.1} parent=23 // pred_fallthru
          _
        %p101 = pneg %p32
        %p102 = pneg %p29
        %p103 = pneg %p58
        %p104 = pneg %p55
        %s105 = sand.u32 %s45, 1
        %s106 = scalar_lea.sflag [#allocation4], %s105
        %s107 = sand.u32 %s45, 1
        %s108 = smul.addr %s107, 8
        %s109 = scalar_lea.vmem [#allocation5], %s108
        %v110 = vld [vmem:[#allocation2] sm:$0xff]
        %111 = vst [vmem:[%s109] sm:$0xff] %v110
        %s112 = sand.u32 %s45, 1
        %s113 = scalar_lea.sflag [#allocation4], %s112
        %s114 = sand.u32 %s45, 1
        %s115 = smul.addr %s114, 8
        %s116 = scalar_lea.vmem [#allocation5], %s115
        // Predicated region
        $region29: #{tpu_custom_call.1} parent=23 // pred_check
          %p117 = pneg %p55
        $region30: #{tpu_custom_call.1} parent=23 // pred_check_branch
          %119 = sbr.rel (%p117) target = $region32
        $region31: #{tpu_custom_call.1} parent=23 // pred_region
          %121 = vsyncadd %s113, 0
          %s122 = smul.addr %s16, 8
          %s123 = scalar_lea.hbm %s1, %s122
          %s125 = sshll.u32 %s116, 4
          %s126 = int_to_ptr.vmem [resolvable:$true] %s125
          %s127 = sshll.u32 %s123, 4
          %s128 = int_to_ptr.hbm [resolvable:$true] %s127
          %130 = dma.vmem_to_hbm [thread:$0]  %s126, 128, %s128, %s113
        $region32: #{tpu_custom_call.1} parent=23 // pred_fallthru
          _
      $region24: #{tpu_custom_call.1} parent=5 // pred_fallthru
        _
      %p131 = scmp.le.s32.totalorder 2, %s11
      // Predicated region
      $region33: #{tpu_custom_call.1} parent=5 // pred_check
        %p132 = pneg %p131
      $region34: #{tpu_custom_call.1} parent=5 // pred_check_branch
        %134 = sbr.rel (%p132) target = $region36
      $region35: #{tpu_custom_call.1} parent=5 // pred_region
        %s135 = ssub.s32 %s11, 2
        // Predicated region
        $region37: #{tpu_custom_call.1} parent=35 // pred_check
          %p136 = pneg %p61
        $region38: #{tpu_custom_call.1} parent=35 // pred_check_branch
          %138 = sbr.rel (%p136) target = $region40
        $region39: #{tpu_custom_call.1} parent=35 // pred_region
          %s139 = sand.u32 %s46, 1
          %s140 = scalar_lea.sflag [#allocation4], %s139
          %s141 = sand.u32 %s46, 1
          %s142 = smul.addr %s141, 8
          %s143 = scalar_lea.vmem [#allocation5], %s142
          %145 = dma.done %s140, 128
        $region40: #{tpu_custom_call.1} parent=35 // pred_fallthru
          _
      $region36: #{tpu_custom_call.1} parent=5 // pred_fallthru
        _
    $region6: #{tpu_custom_call.1} parent=1 // loop_footer
      %s15 = sadd.s32 1, %s11
    $region7: #{tpu_custom_call.1} parent=1 // loop_footer_branch
      %10 = sbr.rel target = $region3
    $region8: #{tpu_custom_call.1} parent=1 // loop_exit
      _
    %146 = vsyncpa [#allocation3], 1
    %s147 = scalar_lea.sflag [#allocation3], 1
    %148 = vsyncpa %s147, 1
    %149 = vsyncpa [#allocation4], 1
    %s150 = scalar_lea.sflag [#allocation4], 1
    %151 = vsyncpa %s150, 1

// kernel: tpu_custom_call.1
$region0: #{tpu_custom_call.1}
  #allocation0 [shape = 'u32[]', space=smem, size = 0x4, offset = 0x4, fixed_abs, tag = 'smem constant byte address 0x4 - core index']
  #allocation1 [shape = 'u32[72,128]{1,0:T(1,128)}', space=vmem, size = 0x9000, scoped, tag = 'internal scratch']
  #allocation2 [shape = 's32[1]{0}', space=sflag, size = 0x4, scoped, tag = 'scoped memory for tpu_custom_call.1']
  #allocation3 [shape = 'u8[512]{0}', space=smem, size = 0x200, scoped, tag = 'prefetched SMEM operand 0']
  %s0 = inlined_call_operand.hbm [shape: s32[16], index: 0, kind: input, shape index: {}]
  %s1 = inlined_call_operand.hbm [shape: f32[64,128], index: 1, kind: input, shape index: {}]
  %s2 = inlined_call_operand.hbm [shape: f32[16,128], index: 2, kind: output, shape index: {}]
  %s3 = sld [smem:[#allocation0]]
  $region25: #{tpu_custom_call.1} parent=0
    _
  %s5 = ssub.s32 1, %s3
  %s6 = scalar_select 0, %s5, %s3
  %s8 = sshll.u32 %s0, 4
  %s9 = int_to_ptr.hbm [resolvable:$true] %s8
  %11 = dma.hbm_to_smem %s9, 16, [#allocation3], [#allocation2]
  %13 = dma.done [#allocation2], 16
  %14 = sfence
  $region1: #{tpu_custom_call.1} parent=0
    #allocation4 [shape = 'u8[32768]{0}', space=vmem, size = 0x8000, scoped, tag = 'input window, operand 1, single buffered']
    #allocation5 [shape = 's32[1]{0}', space=sflag, size = 0x4, scoped, tag = 'scoped memory for tpu_custom_call.1']
    #allocation6 [shape = 's32[1]{0}', space=sflag, size = 0x4, scoped, tag = 'scoped memory for tpu_custom_call.1']
    #allocation7 [shape = 'u8[8192]{0}', space=vmem, size = 0x2000, scoped, tag = 'output window, operand 0, single buffered']
    %15 = vsyncpa [#allocation5], 0
    %16 = vsyncpa [#allocation6], 0
    // Predicated region
    $region2: #{tpu_custom_call.1} parent=1 // pred_check
      _
    $region3: #{tpu_custom_call.1} parent=1 // pred_check_branch
      %18 = sbr.rel (0) target = $region5
    $region4: #{tpu_custom_call.1} parent=1 // pred_region
      %20 = vsyncadd [#allocation5], 0
      %s21 = sshll.u32 %s1, 4
      %s22 = int_to_ptr.hbm [resolvable:$true] %s21
      %s23 = sshll.u32 [#allocation4], 4
      %s24 = int_to_ptr.vmem [resolvable:$true] %s23
      %29 = dma.hbm_to_vmem [thread:$0]  %s22, 1024, %s24, [#allocation5], 128, 128, 8
    $region5: #{tpu_custom_call.1} parent=1 // pred_fallthru
      _
    // Predicated region
    $region6: #{tpu_custom_call.1} parent=1 // pred_check
      _
    $region7: #{tpu_custom_call.1} parent=1 // pred_check_branch
      %31 = sbr.rel (0) target = $region9
    $region8: #{tpu_custom_call.1} parent=1 // pred_region
      %33 = dma.done [#allocation5], 1024
    $region9: #{tpu_custom_call.1} parent=1 // pred_fallthru
      _
    %s34 = smul.u32 0, 16
    loop: start=0, step=1, limit=2
    $region10: #{tpu_custom_call.1} parent=1 // loop_pre_header
      _
    $region11: #{tpu_custom_call.1} parent=1 // loop_header
      %s36 = sphi 0, %s40
      %p37 = scmp.ge.s32.totalorder %s36, 2
    $region12: #{tpu_custom_call.1} parent=1 // loop_header_branch
      %39 = sbr.rel (%p37) target = $region16
    $region13: #{tpu_custom_call.1} parent=1 // loop_body
      %s41 = smul.u32 %s36, 8
      %s42 = sadd.s32 %s34, %s41
      %s43 = sld [smem:[#allocation3 + %s42]]
      %s44 = scalar_lea.vmem [#allocation4], %s43
      %v45 = vld [vmem:[%s44] sm:$0x1]
      %s46 = sadd.s32 %s42, 1
      %s47 = sld [smem:[#allocation3 + %s46]]
      %s48 = scalar_lea.vmem [#allocation4], %s47
      %v49 = vld [vmem:[%s48] sm:$0x1]
      %s50 = sadd.s32 %s42, 2
      %s51 = sld [smem:[#allocation3 + %s50]]
      %s52 = scalar_lea.vmem [#allocation4], %s51
      %v53 = vld [vmem:[%s52] sm:$0x1]
      %s54 = sadd.s32 %s42, 3
      %s55 = sld [smem:[#allocation3 + %s54]]
      %s56 = scalar_lea.vmem [#allocation4], %s55
      %v57 = vld [vmem:[%s56] sm:$0x1]
      %s58 = sadd.s32 %s42, 4
      %s59 = sld [smem:[#allocation3 + %s58]]
      %s60 = scalar_lea.vmem [#allocation4], %s59
      %v61 = vld [vmem:[%s60] sm:$0x1]
      %s62 = sadd.s32 %s42, 5
      %s63 = sld [smem:[#allocation3 + %s62]]
      %s64 = scalar_lea.vmem [#allocation4], %s63
      %v65 = vld [vmem:[%s64] sm:$0x1]
      %s66 = sadd.s32 %s42, 6
      %s67 = sld [smem:[#allocation3 + %s66]]
      %s68 = scalar_lea.vmem [#allocation4], %s67
      %v69 = vld [vmem:[%s68] sm:$0x1]
      %s70 = sadd.s32 %s42, 7
      %s71 = sld [smem:[#allocation3 + %s70]]
      %s72 = scalar_lea.vmem [#allocation4], %s71
      %v73 = vld [vmem:[%s72] sm:$0x1]
      %v75 = vrot.slane %v49, 7
      %v78 = vrot.slane %v53, 6
      %v81 = vrot.slane %v57, 5
      %v84 = vrot.slane %v61, 4
      %v87 = vrot.slane %v65, 3
      %v90 = vrot.slane %v69, 2
      %v93 = vrot.slane %v73, 1
      %vm95 = vcmask 1040384
      %v96 = vsel %vm95, %v45, %v75
      %vm97 = vcmask 1041408
      %v98 = vsel %vm97, %v96, %v78
      %vm99 = vcmask 1042432
      %v100 = vsel %vm99, %v98, %v81
      %vm101 = vcmask 1043456
      %v102 = vsel %vm101, %v100, %v84
      %vm103 = vcmask 1044480
      %v104 = vsel %vm103, %v102, %v87
      %vm105 = vcmask 1045504
      %v106 = vsel %vm105, %v104, %v90
      %vm107 = vcmask 1046528
      %v108 = vsel %vm107, %v106, %v93
      %s109 = scalar_lea.vmem [#allocation7], %s41
      %110 = vst [vmem:[%s109] sm:$0xff] %v108
    $region14: #{tpu_custom_call.1} parent=1 // loop_footer
      %s40 = sadd.s32 1, %s36
    $region15: #{tpu_custom_call.1} parent=1 // loop_footer_branch
      %35 = sbr.rel target = $region11
    $region16: #{tpu_custom_call.1} parent=1 // loop_exit
      _
    // Predicated region
    $region17: #{tpu_custom_call.1} parent=1 // pred_check
      _
    $region18: #{tpu_custom_call.1} parent=1 // pred_check_branch
      %112 = sbr.rel (0) target = $region20
    $region19: #{tpu_custom_call.1} parent=1 // pred_region
      %114 = vsyncadd [#allocation6], 0
      %s115 = sshll.u32 [#allocation7], 4
      %s116 = int_to_ptr.vmem [resolvable:$true] %s115
      %s117 = sshll.u32 %s2, 4
      %s118 = int_to_ptr.hbm [resolvable:$true] %s117
      %123 = dma.vmem_to_hbm [thread:$0]  %s116, 256, %s118, [#allocation6], 128, 128, 8
    $region20: #{tpu_custom_call.1} parent=1 // pred_fallthru
      _
    // Predicated region
    $region21: #{tpu_custom_call.1} parent=1 // pred_check
      _
    $region22: #{tpu_custom_call.1} parent=1 // pred_check_branch
      %125 = sbr.rel (0) target = $region24
    $region23: #{tpu_custom_call.1} parent=1 // pred_region
      %127 = dma.done [#allocation6], 256
    $region24: #{tpu_custom_call.1} parent=1 // pred_fallthru
      _
    %128 = vsyncpa [#allocation5], 1
    %129 = vsyncpa [#allocation6], 1

</llo_original>
